<compile_context>
chip_gen: v5e
topology: v5e:2x2
jax: 0.10.0
libtpu: 0.0.40
codegen_flags: <defaults>
</compile_context>

<pallas_src>
import numpy as np
import jax
import jax.numpy as jnp
from jax import lax
from jax.experimental import pallas as pl
from jax.experimental.pallas import tpu as pltpu


def _make_penc_kernel(chunks_per_group: int):
    """Builds a kernel computing out[r, j] = sin(global_row(r) * freq[j] + bias[j]).

    freq/bias/cosd/sind: (1, L) per-lane constants (cosd/sind = cos/sin(C*freq),
    the advance-by-C-rows rotation).  ramp: (C, 1) = [0..C-1] resident row offsets.
    """

    def kernel(freq_ref, bias_ref, cosd_ref, sind_ref, ramp_ref, out_ref):
        t_rows = out_ref.shape[0]
        C = ramp_ref.shape[0]                      # seed-chunk rows
        reseed = C * chunks_per_group              # rows per re-seed group (divides t_rows)
        n_groups = t_rows // reseed
        r0 = pl.program_id(0) * t_rows             # first global packed-row of this block
        freq = freq_ref[...]
        bias = bias_ref[...]
        ramp = ramp_ref[...]

        if n_groups == 1 and chunks_per_group == 1:
            # Tiny/irregular single block: whole tile in one shot, single transcendental,
            # static full-ref store (no dynamic sublane offsets, no unused cos).
            theta = (ramp + r0.astype(jnp.float32)) * freq + bias
            out_ref[...] = jnp.sin(theta).astype(out_ref.dtype)
            return

        cosd = cosd_ref[...]
        sind = sind_ref[...]

        def group(gidx, carry):
            base = pl.multiple_of(gidx * reseed, reseed)
            # Seed chunk: real sin/cos of the exact angle (bounds recurrence drift).
            theta = (ramp + (r0 + base).astype(jnp.float32)) * freq + bias
            s = jnp.sin(theta)
            c = jnp.cos(theta)
            out_ref[pl.ds(base, C), :] = s.astype(out_ref.dtype)
            # Remaining chunks via angle addition: 4 mul + 2 add per element (VALU-cheap).
            for m in range(1, chunks_per_group):
                s, c = s * cosd + c * sind, c * cosd - s * sind
                start = pl.multiple_of(base + m * C, C)
                out_ref[pl.ds(start, C), :] = s.astype(out_ref.dtype)
            return carry

        lax.fori_loop(0, n_groups, group, 0, unroll=(n_groups <= 8))

    return kernel


def _positional_encoding_table(x: int, orig_ch: int, dtype) -> jax.Array:
    """(x, orig_ch) sinusoidal positional-encoding table computed by the Pallas kernel."""
    if x >= (1 << 24):
        # float32 row indices are exact only below 2**24 (perf-review correctness note).
        raise ValueError("x must be < 2**24 for exact float32 positions")

    channels = int(np.ceil(orig_ch / 2) * 2)       # padded-even count (only affects inv_freq)
    # Match the PyTorch module's f32 inv_freq computation, then derive constants in f64.
    inv_freq32 = (1.0 / (10000.0 ** (np.arange(0, channels, 2, dtype=np.float32)
                                     / np.float32(channels)))).astype(np.float32)

    # ---- lane packing: put k consecutive positions on one row so the output lane
    #      width is a multiple of 128 (unmasked vst), including orig_ch > 128. ----
    k = 1
    if orig_ch % 128 != 0:
        k_cand = int(np.lcm(orig_ch, 128) // orig_ch)
        if k_cand <= x and x % k_cand == 0:
            k = k_cand
    L = k * orig_ch
    rows = x // k

    # Per-lane tables (f64 on host, cast to f32 for the kernel):
    j = np.arange(L)
    c = j % orig_ch                                      # channel index of lane j
    pos_off = (j // orig_ch).astype(np.float64)          # position offset within a packed row
    lane_freq = inv_freq32[c // 2].astype(np.float64)    # (L,)
    phase = (c % 2).astype(np.float64) * (np.pi / 2)     # even lane: sin, odd lane: cos
    scaled_freq = lane_freq * k                          # packed-row index -> angle increment
    bias = pos_off * lane_freq + phase

    # ---- row tiling: cdiv grid, ragged last block handled by Pallas. ----
    itemsize = np.dtype(dtype).itemsize
    pack = {4: 8, 2: 16, 1: 32}.get(itemsize, 8)         # rows per fully-packed vreg group
    bytes_per_row = L * itemsize
    target_rows = max((512 * 4) // itemsize,             # ~512 f32 / ~1024 bf16 rows
                      (2 * 1024 * 1024) // bytes_per_row)  # but >= ~2 MiB for narrow L
    cap_rows = max(pack, (4 * 1024 * 1024) // bytes_per_row)  # <=4 MiB/block: 2x-buffered fits
    t_rows = min(target_rows, cap_rows)                       # v5e/v6e/v7x scoped VMEM

    if t_rows >= rows:
        if rows >= 128:
            # Split into >= 2 blocks so the "parallel" axis feeds both v7x TensorCores.
            half = (rows + 1) // 2
            t_rows = ((half + 63) // 64) * 64
        else:
            t_rows = rows                                  # single full-extent block (legal)
    else:
        t_rows = (t_rows // 64) * 64 if t_rows >= 64 else max(pack, (t_rows // pack) * pack)
    n_tiles = pl.cdiv(rows, t_rows)

    # ---- seed-chunk / re-seed-group structure for the in-kernel recurrence ----
    if t_rows % pack == 0:
        C = pack
        n_chunks = t_rows // C
        chunks_per_group = 1
        for g in (8, 4, 2):                                # re-seed every <= 128 rows
            if n_chunks % g == 0 and g * C <= 128:
                chunks_per_group = g
                break
    else:                                                  # tiny irregular single block
        C = t_rows
        chunks_per_group = 1

    f32 = np.float32
    freq_arr = scaled_freq.astype(f32).reshape(1, L)
    bias_arr = bias.astype(f32).reshape(1, L)
    delta = float(C) * scaled_freq                         # advance-by-C-rows angle (f64)
    cosd_arr = np.cos(delta).astype(f32).reshape(1, L)
    sind_arr = np.sin(delta).astype(f32).reshape(1, L)
    ramp_arr = np.arange(C, dtype=f32).reshape(C, 1)

    table = pl.pallas_call(
        _make_penc_kernel(chunks_per_group),
        out_shape=jax.ShapeDtypeStruct((rows, L), dtype),
        grid_spec=pltpu.PrefetchScalarGridSpec(
            num_scalar_prefetch=0,
            grid=(n_tiles,),
            in_specs=[pl.BlockSpec((1, L), lambda i: (0, 0)),   # freq  (resident)
                      pl.BlockSpec((1, L), lambda i: (0, 0)),   # bias  (resident)
                      pl.BlockSpec((1, L), lambda i: (0, 0)),   # cosd  (resident)
                      pl.BlockSpec((1, L), lambda i: (0, 0)),   # sind  (resident)
                      pl.BlockSpec((C, 1), lambda i: (0, 0))],  # ramp  (resident)
            out_specs=pl.BlockSpec((t_rows, L), lambda i: (i, 0)),
        ),
        compiler_params=pltpu.CompilerParams(
            dimension_semantics=("parallel",)),
    )(jnp.asarray(freq_arr), jnp.asarray(bias_arr),
      jnp.asarray(cosd_arr), jnp.asarray(sind_arr), jnp.asarray(ramp_arr))

    # Free row-major reshape: (rows, k*orig_ch) -> (x, orig_ch).
    return table.reshape(x, orig_ch)


def positional_encoding_1d(tensor: jax.Array) -> jax.Array:
    """Mirror of PositionalEncoding1D.forward: (batch, x, ch) positional encoding.

    The (x, ch) table is computed once by the kernel; the batch broadcast is left to
    XLA (it stays lazy / fuses when consumed inside the caller's jit — materializing
    per-batch copies in HBM would dominate total time for batch > 1).
    """
    if tensor.ndim != 3:
        raise RuntimeError("The input tensor has to be 3d!")
    batch, x, orig_ch = tensor.shape
    emb = _positional_encoding_table(x, orig_ch, tensor.dtype)
    # TODO(synk): the module's stateful `cached_penc` cache is not replicated here.
    return jnp.broadcast_to(emb[None], (batch, x, orig_ch))


def _reference(shape) -> np.ndarray:
    """NumPy (float32) reference of the PyTorch forward."""
    batch, x, orig_ch = shape
    channels = int(np.ceil(orig_ch / 2) * 2)
    inv_freq = 1.0 / (10000.0 ** (np.arange(0, channels, 2, dtype=np.float32)
                                  / np.float32(channels)))
    pos = np.arange(x, dtype=np.float32)
    sin_inp = np.einsum("i,j->ij", pos, inv_freq)            # (x, channels//2)
    emb = np.stack((np.sin(sin_inp), np.cos(sin_inp)), -1).reshape(x, channels)
    return np.broadcast_to(emb[None, :, :orig_ch], (batch, x, orig_ch)).astype(np.float32)


if __name__ == "__main__":
    key = jax.random.PRNGKey(0)

    # 1) Even channels, k=4 lane packing, tiny single-block (whole-tile) path.
    x1 = jax.random.normal(key, (2, 8, 32), dtype=jnp.float32)
    pe1 = jax.block_until_ready(positional_encoding_1d(x1))
    np.testing.assert_allclose(np.asarray(pe1, np.float32), _reference(x1.shape),
                               rtol=1e-5, atol=1e-5)
    assert pe1.shape == x1.shape and pe1.dtype == x1.dtype

    # 2) Odd channel count: k=1 fallback, L=7 lanes, recurrence with 2 chunks/group.
    x2 = jax.random.normal(key, (3, 16, 7), dtype=jnp.float32)
    pe2 = jax.block_until_ready(positional_encoding_1d(x2))
    np.testing.assert_allclose(np.asarray(pe2, np.float32), _reference(x2.shape),
                               rtol=1e-5, atol=1e-5)
    assert pe2.shape == x2.shape and pe2.dtype == x2.dtype

    # 3) orig_ch > 128 lane packing (k=2, L=384) + 2-tile cdiv grid with a ragged last
    #    block + angle-addition recurrence.  Tolerance reflects f32 angle rounding
    #    (~position * 2e-7 rad), which the f32 PyTorch reference exhibits equally.
    x3 = jax.random.normal(key, (2, 320, 192), dtype=jnp.float32)
    pe3 = jax.block_until_ready(positional_encoding_1d(x3))
    np.testing.assert_allclose(np.asarray(pe3, np.float32), _reference(x3.shape),
                               rtol=1e-4, atol=5e-4)
    assert pe3.shape == x3.shape and pe3.dtype == x3.dtype

    # 4) bf16 output: in-kernel cast, 16-row packed store chunks, 2-tile grid.
    x4 = jax.random.normal(key, (2, 256, 64), dtype=jnp.bfloat16)
    pe4 = jax.block_until_ready(positional_encoding_1d(x4))
    np.testing.assert_allclose(np.asarray(pe4, np.float32), _reference(x4.shape),
                               rtol=1e-2, atol=1e-2)
    assert pe4.shape == x4.shape and pe4.dtype == x4.dtype

    print("KERNEL_OK")
</pallas_src>

<mosaic_0001>
module attributes {stable_mosaic.version = 11 : i64} {
  func.func @kernel(%arg0: i32, %arg1: memref<1x128xf32, #tpu.memory_space<vmem>>, %arg2: memref<1x128xf32, #tpu.memory_space<vmem>>, %arg3: memref<1x128xf32, #tpu.memory_space<vmem>>, %arg4: memref<1x128xf32, #tpu.memory_space<vmem>>, %arg5: memref<2x1xf32, #tpu.memory_space<vmem>>, %arg6: memref<2x128xf32, #tpu.memory_space<vmem>>) attributes {dimension_semantics = [#tpu.dimension_semantics<parallel>], iteration_bounds = array<i64: 1>, scalar_prefetch = 0 : i64, scratch_operands = 0 : i64, tpu.core_type = #tpu.core_type<tc>, window_params = [{pipeline_mode = #tpu.pipeline_mode<synchronous>, transform_indices = @transform_0, window_bounds = array<i64: 1, 128>}, {pipeline_mode = #tpu.pipeline_mode<synchronous>, transform_indices = @transform_1, window_bounds = array<i64: 1, 128>}, {pipeline_mode = #tpu.pipeline_mode<synchronous>, transform_indices = @transform_2, window_bounds = array<i64: 1, 128>}, {pipeline_mode = #tpu.pipeline_mode<synchronous>, transform_indices = @transform_3, window_bounds = array<i64: 1, 128>}, {pipeline_mode = #tpu.pipeline_mode<synchronous>, transform_indices = @transform_4, window_bounds = array<i64: 2, 1>}, {transform_indices = @transform_5, window_bounds = array<i64: 2, 128>}]} {
    %c2_i32 = arith.constant 2 : i32
    %0 = arith.muli %arg0, %c2_i32 : i32
    %c0 = arith.constant 0 : index
    %c0_0 = arith.constant 0 : index
    %1 = vector.load %arg1[%c0, %c0_0] : memref<1x128xf32, #tpu.memory_space<vmem>>, vector<1x128xf32>
    %c0_1 = arith.constant 0 : index
    %c0_2 = arith.constant 0 : index
    %2 = vector.load %arg2[%c0_1, %c0_2] : memref<1x128xf32, #tpu.memory_space<vmem>>, vector<1x128xf32>
    %c0_3 = arith.constant 0 : index
    %c0_4 = arith.constant 0 : index
    %3 = vector.load %arg5[%c0_3, %c0_4] : memref<2x1xf32, #tpu.memory_space<vmem>>, vector<2x1xf32>
    %4 = arith.sitofp %0 : i32 to f32
    %5 = vector.broadcast %4 : f32 to vector<2x1xf32>
    %6 = arith.addf %3, %5 : vector<2x1xf32>
    %7 = vector.broadcast %6 : vector<2x1xf32> to vector<2x128xf32>
    %8 = vector.broadcast %1 : vector<1x128xf32> to vector<2x128xf32>
    %9 = arith.mulf %7, %8 : vector<2x128xf32>
    %10 = vector.broadcast %2 : vector<1x128xf32> to vector<2x128xf32>
    %11 = arith.addf %9, %10 : vector<2x128xf32>
    %12 = math.sin %11 : vector<2x128xf32>
    %c0_5 = arith.constant 0 : index
    %c0_6 = arith.constant 0 : index
    %13 = vector.load %arg6[%c0_5, %c0_6] : memref<2x128xf32, #tpu.memory_space<vmem>>, vector<2x128xf32>
    tpu.vector_store %arg6[%c0_5, %c0_6], %12 {strides = array<i32>} : memref<2x128xf32, #tpu.memory_space<vmem>>, vector<2x128xf32>,
    return
  }
  func.func @transform_0(%arg0: i32) -> (i32, i32) {
    %c0_i32 = arith.constant 0 : i32
    %c0_i32_0 = arith.constant 0 : i32
    %c0_i32_1 = arith.constant 0 : i32
    return %c0_i32, %c0_i32_0 : i32, i32
  }
  func.func @transform_1(%arg0: i32) -> (i32, i32) {
    %c0_i32 = arith.constant 0 : i32
    %c0_i32_0 = arith.constant 0 : i32
    %c0_i32_1 = arith.constant 0 : i32
    return %c0_i32, %c0_i32_0 : i32, i32
  }
  func.func @transform_2(%arg0: i32) -> (i32, i32) {
    %c0_i32 = arith.constant 0 : i32
    %c0_i32_0 = arith.constant 0 : i32
    %c0_i32_1 = arith.constant 0 : i32
    return %c0_i32, %c0_i32_0 : i32, i32
  }
  func.func @transform_3(%arg0: i32) -> (i32, i32) {
    %c0_i32 = arith.constant 0 : i32
    %c0_i32_0 = arith.constant 0 : i32
    %c0_i32_1 = arith.constant 0 : i32
    return %c0_i32, %c0_i32_0 : i32, i32
  }
  func.func @transform_4(%arg0: i32) -> (i32, i32) {
    %c0_i32 = arith.constant 0 : i32
    %c0_i32_0 = arith.constant 0 : i32
    %c0_i32_1 = arith.constant 0 : i32
    return %c0_i32, %c0_i32_0 : i32, i32
  }
  func.func @transform_5(%arg0: i32) -> (i32, i32) {
    %c0_i32 = arith.constant 0 : i32
    %c0_i32_0 = arith.constant 0 : i32
    return %arg0, %c0_i32 : i32, i32
  }
}

</mosaic_0001>

<llo_original>
// kernel: tpu_custom_call.1
$region0: #{tpu_custom_call.1}
  #allocation0 [shape = 'u32[]', space=smem, size = 0x4, offset = 0x4, fixed_abs, tag = 'smem constant byte address 0x4 - core index']
  #allocation1 [shape = 'u32[72,128]{1,0:T(1,128)}', space=vmem, size = 0x9000, scoped, tag = 'internal scratch']
  %s0 = inlined_call_operand.vmem [shape: f32[1,128], index: 0, kind: input, shape index: {}]
  %s1 = inlined_call_operand.vmem [shape: f32[1,128], index: 1, kind: input, shape index: {}]
  %s2 = inlined_call_operand.vmem [shape: f32[1,128], index: 2, kind: input, shape index: {}]
  %s3 = inlined_call_operand.vmem [shape: f32[1,128], index: 3, kind: input, shape index: {}]
  %s4 = inlined_call_operand.vmem [shape: f32[2,1], index: 4, kind: input, shape index: {}]
  %s5 = inlined_call_operand.hbm [shape: f32[2,128], index: 5, kind: output, shape index: {}]
  %s6 = sld [smem:[#allocation0]]
  $region30: #{tpu_custom_call.1} parent=0
    _
  %s8 = ssub.s32 1, %s6
  %s9 = scalar_select 0, %s8, %s6
  $region1: #{tpu_custom_call.1} parent=0
    #allocation2 [shape = 'u8[1024]{0}', space=vmem, size = 0x400, scoped, tag = 'output window, operand 0, single buffered']
    #allocation3 [shape = 's32[1]{0}', space=sflag, size = 0x4, scoped, tag = 'scoped memory for tpu_custom_call.1']
    %10 = vsyncpa [#allocation3], 0
    // Predicated region
    $region2: #{tpu_custom_call.1} parent=1 // pred_check
      _
    $region3: #{tpu_custom_call.1} parent=1 // pred_check_branch
      %12 = sbr.rel (0) target = $region5
    $region4: #{tpu_custom_call.1} parent=1 // pred_region
      _
    $region5: #{tpu_custom_call.1} parent=1 // pred_fallthru
      _
    // Predicated region
    $region6: #{tpu_custom_call.1} parent=1 // pred_check
      _
    $region7: #{tpu_custom_call.1} parent=1 // pred_check_branch
      %14 = sbr.rel (0) target = $region9
    $region8: #{tpu_custom_call.1} parent=1 // pred_region
      _
    $region9: #{tpu_custom_call.1} parent=1 // pred_fallthru
      _
    // Predicated region
    $region10: #{tpu_custom_call.1} parent=1 // pred_check
      _
    $region11: #{tpu_custom_call.1} parent=1 // pred_check_branch
      %16 = sbr.rel (0) target = $region13
    $region12: #{tpu_custom_call.1} parent=1 // pred_region
      _
    $region13: #{tpu_custom_call.1} parent=1 // pred_fallthru
      _
    // Predicated region
    $region14: #{tpu_custom_call.1} parent=1 // pred_check
      _
    $region15: #{tpu_custom_call.1} parent=1 // pred_check_branch
      %18 = sbr.rel (0) target = $region17
    $region16: #{tpu_custom_call.1} parent=1 // pred_region
      _
    $region17: #{tpu_custom_call.1} parent=1 // pred_fallthru
      _
    // Predicated region
    $region18: #{tpu_custom_call.1} parent=1 // pred_check
      _
    $region19: #{tpu_custom_call.1} parent=1 // pred_check_branch
      %20 = sbr.rel (0) target = $region21
    $region20: #{tpu_custom_call.1} parent=1 // pred_region
      _
    $region21: #{tpu_custom_call.1} parent=1 // pred_fallthru
      _
    %s21 = smul.u32 0, 2
    %v22 = vld [vmem:[%s0] sm:$0x1]
    %v23 = vld [vmem:[%s1] sm:$0x1]
    %v24 = vld [vmem:[%s4] sm:$0x3]
    %s25 = scvt.s32.f32 %s21
    %v26 = vstv %s25
    %v27 = vadd.f32 %v24, %v26
    %29 = vset.pattern.permute.xlu0 0
    %30 = vperm.xlu0 %29, %v27
    %v31 = vpop.permute.xlu0 %30
    %v34 = vperm.slane %v22, 0
    %v36 = vmul.f32 %v31, %v34
    %v38 = vperm.slane %v23, 0
    %v40 = vadd.f32 %v36, %v38
    %v41 = vand.u32 2147483647, %v40
    %vm42 = vcmp.le.f32.partialorder %v41, 0.7853982
    %vm43 = vcmp.lt.s32.totalorder %v40, 0
    %v44 = vand.u32 %v40, 2139095040
    %v45 = vshrl.u32 %v44, 23
    %v46 = vsub.s32 %v45, 127
    %v47 = vand.u32 2147483647, %v40
    %v48 = vand.u32 %v47, 8388607
    %v49 = vor.u32 %v48, 8388608
    %v50 = vsub.s32 0, %v49
    %v51 = vadd.s32 %v46, 1
    %vm52 = vcmp.gt.s32.totalorder %v51, 0
    %v53 = vsel %vm52, %v51, 0
    %v54 = vshrl.u32 %v53, 5
    %v55 = vand.u32 %v53, 31
    %v56 = vsub.s32 32, %v55
    %v57 = vshrl.u32 683565275, %v56
    %v58 = vshll.u32 683565275, %v55
    %v59 = vshrl.u32 2475754826, %v56
    %v60 = vor.u32 %v58, %v59
    %v61 = vshll.u32 2475754826, %v55
    %v62 = vshrl.u32 2131351028, %v56
    %v63 = vor.u32 %v61, %v62
    %v64 = vshll.u32 2131351028, %v55
    %v65 = vshrl.u32 2102212464, %v56
    %v66 = vor.u32 %v64, %v65
    %v67 = vshll.u32 2102212464, %v55
    %v68 = vshrl.u32 920167782, %v56
    %v69 = vor.u32 %v67, %v68
    %v70 = vshll.u32 920167782, %v55
    %v71 = vshrl.u32 1326507024, %v56
    %v72 = vor.u32 %v70, %v71
    %vm73 = vcmp.lt.s32.totalorder %v54, 1
    %vm74 = vcmp.lt.s32.totalorder %v54, 2
    %vm75 = vcmp.lt.s32.totalorder %v54, 3
    %vm76 = vcmp.lt.s32.totalorder %v54, 4
    %v77 = vsel %vm73, %v57, %v60
    %v78 = vsel %vm76, %v66, 2102212464
    %v79 = vsel %vm75, %v63, %v78
    %v80 = vsel %vm74, %v77, %v79
    %v81 = vsel %vm73, %v60, %v63
    %v82 = vsel %vm76, %v69, 920167782
    %v83 = vsel %vm75, %v66, %v82
    %v84 = vsel %vm74, %v81, %v83
    %v85 = vsel %vm73, %v63, %v66
    %v86 = vsel %vm76, %v72, 1326507024
    %v87 = vsel %vm75, %v69, %v86
    %v88 = vsel %vm74, %v85, %v87
    %v89 = vshll.u32 %v49, 8
    %v90 = vand.u32 %v89, 65535
    %v91 = vshrl.u32 %v89, 16
    %v92 = vand.u32 %v88, 65535
    %v93 = vshrl.u32 %v88, 16
    %v94 = vmul.u32 %v90, %v92
    %v95 = vmul.u32 %v90, %v93
    %v96 = vmul.u32 %v91, %v92
    %v97 = vmul.u32 %v91, %v93
    %v98 = vshll.u32 %v95, 16
    %v99 = vshrl.u32 %v95, 16
    %v100 = vshll.u32 %v96, 16
    %v101 = vshrl.u32 %v96, 16
    %vm102 = vc.u32 %v94, %v98
    %v103 = vsel %vm102, 1, 0
    %v104 = vadd.s32 %v94, %v98
    %v105 = vadd.s32 %v97, %v103
    %vm106 = vc.u32 %v104, %v100
    %v107 = vsel %vm106, 1, 0
    %v108 = vadd.s32 %v104, %v100
    %v109 = vadd.s32 %v105, %v107
    %v110 = vadd.s32 %v109, %v99
    %v111 = vadd.s32 %v110, %v101
    %v112 = vand.u32 %v89, 65535
    %v113 = vshrl.u32 %v89, 16
    %v114 = vand.u32 %v84, 65535
    %v115 = vshrl.u32 %v84, 16
    %v116 = vmul.u32 %v112, %v114
    %v117 = vmul.u32 %v112, %v115
    %v118 = vmul.u32 %v113, %v114
    %v119 = vmul.u32 %v113, %v115
    %v120 = vshll.u32 %v117, 16
    %v121 = vshrl.u32 %v117, 16
    %v122 = vshll.u32 %v118, 16
    %v123 = vshrl.u32 %v118, 16
    %vm124 = vc.u32 %v116, %v120
    %v125 = vsel %vm124, 1, 0
    %v126 = vadd.s32 %v116, %v120
    %v127 = vadd.s32 %v119, %v125
    %vm128 = vc.u32 %v126, %v122
    %v129 = vsel %vm128, 1, 0
    %v130 = vadd.s32 %v126, %v122
    %v131 = vadd.s32 %v127, %v129
    %v132 = vadd.s32 %v131, %v121
    %v133 = vadd.s32 %v132, %v123
    %v134 = vmul.u32 %v89, %v80
    %v135 = vadd.s32 %v111, %v130
    %vm136 = vc.u32 %v111, %v130
    %v137 = vadd.s32 %v133, 1
    %v138 = vsel %vm136, %v137, %v133
    %v139 = vadd.s32 %v134, %v138
    %v140 = vadd.s32 %v139, 536870912
    %v141 = vshrl.u32 %v140, 30
    %v142 = vshll.u32 %v141, 30
    %v143 = vsub.s32 %v139, %v142
    %vm144 = vcmp.lt.s32.totalorder %v143, 0
    %v145 = vsub.s32 0, %v143
    %v146 = vsel %vm144, %v145, %v143
    %v147 = vclz %v146
    %v148 = vsub.s32 %v147, 2
    %vm149 = vcmp.gt.s32.totalorder 0, %v148
    %v150 = vsel %vm149, 0, %v148
    %v151 = vsub.s32 32, %v150
    %v152 = vshll.u32 %v143, %v150
    %v153 = vshrl.u32 %v135, %v151
    %v154 = vor.u32 %v152, %v153
    %v155 = vsub.s32 4294967266, %v150
    %v156 = vadd.s32 %v155, 127
    %v157 = vshll.u32 %v156, 23
    %v158 = vor.u32 4788187, %v157
    %v159 = vand.u32 2147483647, %v158
    %v161 = vcvt.s32.f32 %v154
    %v162 = vmul.f32 %v161, %v159
    %v163 = vxor.u32 %v162, 2147483648
    %v164 = vsel %vm43, %v163, %v162
    %v165 = vsub.s32 4, %v141
    %v166 = vsel %vm43, %v165, %v141
    %v167 = vsel %vm42, %v40, %v164
    %v168 = vsel %vm42, 0, %v166
    %v169 = vmul.f32 %v167, %v167
    %v170 = vmul.f32 %v169, -0.001358992
    %v171 = vadd.f32 %v170, 0.041655596
    %v172 = vmul.f32 %v169, %v171
    %v173 = vadd.f32 %v172, -0.4999988
    %v174 = vmul.f32 %v169, %v173
    %v175 = vadd.f32 1.0, %v174
    %v176 = vmul.f32 %v167, %v167
    %v177 = vmul.f32 %v176, -0.00019511016
    %v178 = vadd.f32 %v177, 0.008332121
    %v179 = vmul.f32 %v176, %v178
    %v180 = vadd.f32 %v179, -0.16666654
    %v181 = vmul.f32 %v176, %v180
    %v182 = vadd.f32 %v181, 1.0
    %v183 = vmul.f32 %v182, %v167
    %vm184 = vweird.f32 %v40
    %v185 = vadd.s32 %v168, 3
    %v186 = vand.u32 %v185, 3
    %vm187 = vcmp.lt.s32.totalorder %v186, 2
    %vm188 = vcmp.eq.s32.totalorder %v186, 0
    %v189 = vxor.u32 %v183, 2147483648
    %v190 = vsel %vm188, %v175, %v189
    %vm191 = vcmp.eq.s32.totalorder %v186, 2
    %v192 = vxor.u32 %v175, 2147483648
    %v193 = vsel %vm191, %v192, %v183
    %v194 = vsel %vm187, %v190, %v193
    %v195 = vsel %vm184, nan, %v194
    %196 = vst [vmem:[#allocation2] sm:$0x3] %v195
    // Predicated region
    $region22: #{tpu_custom_call.1} parent=1 // pred_check
      _
    $region23: #{tpu_custom_call.1} parent=1 // pred_check_branch
      %198 = sbr.rel (0) target = $region25
    $region24: #{tpu_custom_call.1} parent=1 // pred_region
      %200 = vsyncadd [#allocation3], 0
      %s202 = sshll.u32 [#allocation2], 4
      %s203 = int_to_ptr.vmem [resolvable:$true] %s202
      %s204 = sshll.u32 %s5, 4
      %s205 = int_to_ptr.hbm [resolvable:$true] %s204
      %207 = dma.vmem_to_hbm [thread:$0]  %s203, 32, %s205, [#allocation3]
    $region25: #{tpu_custom_call.1} parent=1 // pred_fallthru
      _
    // Predicated region
    $region26: #{tpu_custom_call.1} parent=1 // pred_check
      _
    $region27: #{tpu_custom_call.1} parent=1 // pred_check_branch
      %209 = sbr.rel (0) target = $region29
    $region28: #{tpu_custom_call.1} parent=1 // pred_region
      %211 = dma.done [#allocation3], 32
    $region29: #{tpu_custom_call.1} parent=1 // pred_fallthru
      _
    %212 = vsyncpa [#allocation3], 1

</llo_original>
